<compile_context>
chip_gen: v7x
topology: tpu7x:2x2x1
jax: 0.10.0
libtpu: 0.0.40
codegen_flags: <defaults>
</compile_context>

<pallas_src>
import jax
import jax.numpy as jnp
from jax.experimental import pallas as pl
from jax.experimental.pallas import tpu as pltpu


def seg_kernel(frames_ref, wf_ref, bf_ref, w1_ref, b1_ref, w2_ref, b2_ref,
               wo_ref, bo_ref, out_ref):
    # frames_ref: (C, tile_f, frame_len) f32 -- raw waveform frames.
    # Cast to bf16 on-chip (free VPU slack in a memory-bound kernel) instead of
    # a separate wrapper-side astype pass over HBM.
    channels = frames_ref.shape[0]

    # "SincNet"-style frontend conv (kernel == stride) as per-channel matmuls;
    # the (channel, sample) permutation is folded into wf's layout, so no
    # waveform transpose is ever materialized.  Static unroll: C is tiny.
    h = jnp.zeros((frames_ref.shape[1], wf_ref.shape[2]), jnp.float32)
    for c in range(channels):
        h = h + jnp.dot(frames_ref[c].astype(jnp.bfloat16), wf_ref[c],
                        preferred_element_type=jnp.float32)
    h = jnp.maximum(h + bf_ref[...], 0.0).astype(jnp.bfloat16)

    # Feedforward temporal encoder (stand-in for the LSTM).
    h = jnp.dot(h, w1_ref[...], preferred_element_type=jnp.float32) + b1_ref[...]
    h = jnp.maximum(h, 0.0).astype(jnp.bfloat16)
    h = jnp.dot(h, w2_ref[...], preferred_element_type=jnp.float32) + b2_ref[...]
    h = jnp.maximum(h, 0.0).astype(jnp.bfloat16)

    # Per-frame speaker classifier (padded to a multiple of 8 cols) + sigmoid.
    logits = jnp.dot(h, wo_ref[...], preferred_element_type=jnp.float32) + bo_ref[...]
    out_ref[...] = jax.nn.sigmoid(logits)


def _choose_tile_frames(n_frames, batch, tile_frames):
    """Pick the frame-axis tile: large (default 256) for DMA/roofline
    efficiency, multiple of 8 sublanes, and split so the grid has >= 2 steps
    (both v7x TensorCores get work) whenever the problem allows it."""
    tf = min(tile_frames, n_frames)
    if tf < n_frames:
        tf = max(8, (tf // 8) * 8)
    if batch * pl.cdiv(n_frames, tf) < 2 and n_frames >= 16:
        tf = (((n_frames + 1) // 2) + 7) // 8 * 8
    return tf


def pyannote_segmentation_forward(waveform, params, frame_len, n_speakers,
                                  *, tile_frames=256):
    """waveform: (B, C, T) float32  ->  (B, n_frames, n_speakers) float32."""
    B, C, T = waveform.shape
    n_frames = T // frame_len
    wf, bf, w1, b1, w2, b2, wo, bo = params
    assert wf.shape[0] == C and wf.shape[1] == frame_len
    n_out = wo.shape[-1]  # speaker count padded up to a multiple of 8

    # im2col of the non-overlapping strided conv frontend: a pure reshape of a
    # contiguous slice -- no transpose, no cast, no padding copies in HBM.
    frames = waveform[:, :, : n_frames * frame_len].reshape(B, C, n_frames, frame_len)

    tile_f = _choose_tile_frames(n_frames, B, tile_frames)
    num_tiles = pl.cdiv(n_frames, tile_f)

    # Weights/biases: full blocks with constant index_maps -> fetched once and
    # kept resident in VMEM; only the waveform frames stream from HBM.
    resident = lambda a: pl.BlockSpec(a.shape, lambda b, j: (0,) * a.ndim)

    out = pl.pallas_call(
        seg_kernel,
        out_shape=jax.ShapeDtypeStruct((B, n_frames, n_out), jnp.float32),
        grid=(B, num_tiles),
        in_specs=[
            pl.BlockSpec((None, C, tile_f, frame_len), lambda b, j: (b, 0, j, 0)),
            resident(wf), resident(bf),
            resident(w1), resident(b1),
            resident(w2), resident(b2),
            resident(wo), resident(bo),
        ],
        out_specs=pl.BlockSpec((None, tile_f, n_out), lambda b, j: (b, j, 0)),
        compiler_params=pltpu.CompilerParams(
            dimension_semantics=("parallel", "parallel"),
        ),
    )(frames, wf, bf, w1, b1, w2, b2, wo, bo)

    # Drop the zero-padded speaker columns (sigmoid(0)=0.5 filler).
    return out[:, :, :n_speakers]


def init_params(key, channels, frame_len, feat_dim, hidden_dim, n_speakers):
    """bf16 weights (MXU path), f32 biases. Frontend weight is laid out
    per-channel (C, frame_len, feat) so the channel permutation is folded into
    the weights; classifier is zero-padded to a multiple of 8 columns."""
    n_out = -(-n_speakers // 8) * 8
    kf, k1, k2, ko = jax.random.split(key, 4)

    def dense(k, shape, fan_in):
        w = jax.random.normal(k, shape, jnp.float32) / jnp.sqrt(jnp.float32(fan_in))
        return w.astype(jnp.bfloat16)

    wf = dense(kf, (channels, frame_len, feat_dim), channels * frame_len)
    bf = jnp.zeros((1, feat_dim), jnp.float32)
    w1 = dense(k1, (feat_dim, hidden_dim), feat_dim)
    b1 = jnp.zeros((1, hidden_dim), jnp.float32)
    w2 = dense(k2, (hidden_dim, hidden_dim), hidden_dim)
    b2 = jnp.zeros((1, hidden_dim), jnp.float32)
    wo_full = jax.random.normal(ko, (hidden_dim, n_speakers), jnp.float32)
    wo_full = wo_full / jnp.sqrt(jnp.float32(hidden_dim))
    wo = jnp.pad(wo_full, ((0, 0), (0, n_out - n_speakers))).astype(jnp.bfloat16)
    bo = jnp.zeros((1, n_out), jnp.float32)
    return (wf, bf, w1, b1, w2, b2, wo, bo)


if __name__ == "__main__":
    key = jax.random.PRNGKey(0)
    k_wave, k_params = jax.random.split(key)

    # Small, shape-consistent example: (batch, channels, samples).
    B, C, T = 2, 1, 24576          # ~1.5 s of 16 kHz mono audio per batch element
    frame_len = 256                # conv kernel == stride (non-overlapping frames)
    feat_dim = 128
    hidden_dim = 128
    n_speakers = 4

    n_frames = T // frame_len      # 96 frames -> grid (B=2, 1 frame-tile) = 2 steps

    waveform = jax.random.normal(k_wave, (B, C, T), jnp.float32)
    params = init_params(k_params, C, frame_len, feat_dim, hidden_dim, n_speakers)

    out = pyannote_segmentation_forward(waveform, params, frame_len, n_speakers)
    out = jax.block_until_ready(out)

    assert out.shape == (B, n_frames, n_speakers), out.shape
    assert out.dtype == jnp.float32
    assert bool(jnp.all(jnp.isfinite(out)))
    assert bool(jnp.all((out >= 0.0) & (out <= 1.0)))   # sigmoid range
    print("KERNEL_OK")
</pallas_src>

<mosaic_0001>
module attributes {stable_mosaic.version = 11 : i64} {
  func.func @seg_kernel(%arg0: i32, %arg1: i32, %arg2: memref<1x1x96x256xf32, #tpu.memory_space<vmem>>, %arg3: memref<1x256x128xbf16, #tpu.memory_space<vmem>>, %arg4: memref<1x128xf32, #tpu.memory_space<vmem>>, %arg5: memref<128x128xbf16, #tpu.memory_space<vmem>>, %arg6: memref<1x128xf32, #tpu.memory_space<vmem>>, %arg7: memref<128x128xbf16, #tpu.memory_space<vmem>>, %arg8: memref<1x128xf32, #tpu.memory_space<vmem>>, %arg9: memref<128x8xbf16, #tpu.memory_space<vmem>>, %arg10: memref<1x8xf32, #tpu.memory_space<vmem>>, %arg11: memref<1x96x8xf32, #tpu.memory_space<vmem>>) attributes {dimension_semantics = [#tpu.dimension_semantics<parallel>, #tpu.dimension_semantics<parallel>], iteration_bounds = array<i64: 2, 1>, scalar_prefetch = 0 : i64, scratch_operands = 0 : i64, tpu.core_type = #tpu.core_type<tc>, window_params = [{transform_indices = @transform_0, window_bounds = array<i64: 1, 1, 96, 256>}, {pipeline_mode = #tpu.pipeline_mode<synchronous>, transform_indices = @transform_1, window_bounds = array<i64: 1, 256, 128>}, {pipeline_mode = #tpu.pipeline_mode<synchronous>, transform_indices = @transform_2, window_bounds = array<i64: 1, 128>}, {pipeline_mode = #tpu.pipeline_mode<synchronous>, transform_indices = @transform_3, window_bounds = array<i64: 128, 128>}, {pipeline_mode = #tpu.pipeline_mode<synchronous>, transform_indices = @transform_4, window_bounds = array<i64: 1, 128>}, {pipeline_mode = #tpu.pipeline_mode<synchronous>, transform_indices = @transform_5, window_bounds = array<i64: 128, 128>}, {pipeline_mode = #tpu.pipeline_mode<synchronous>, transform_indices = @transform_6, window_bounds = array<i64: 1, 128>}, {pipeline_mode = #tpu.pipeline_mode<synchronous>, transform_indices = @transform_7, window_bounds = array<i64: 128, 8>}, {pipeline_mode = #tpu.pipeline_mode<synchronous>, transform_indices = @transform_8, window_bounds = array<i64: 1, 8>}, {transform_indices = @transform_9, window_bounds = array<i64: 1, 96, 8>}]} {
    %cst = arith.constant 0.000000e+00 : f32
    %0 = vector.broadcast %cst : f32 to vector<96x128xf32>
    %c0 = arith.constant 0 : index
    %c0_0 = arith.constant 0 : index
    %c0_1 = arith.constant 0 : index
    %c0_2 = arith.constant 0 : index
    %1 = vector.load %arg2[%c0, %c0_0, %c0_1, %c0_2] : memref<1x1x96x256xf32, #tpu.memory_space<vmem>>, vector<1x1x96x256xf32>
    %2 = vector.shape_cast %1 : vector<1x1x96x256xf32> to vector<96x256xf32>
    %3 = arith.truncf %2 : vector<96x256xf32> to vector<96x256xbf16>
    %c0_3 = arith.constant 0 : index
    %c0_4 = arith.constant 0 : index
    %c0_5 = arith.constant 0 : index
    %4 = vector.load %arg3[%c0_3, %c0_4, %c0_5] : memref<1x256x128xbf16, #tpu.memory_space<vmem>>, vector<1x256x128xbf16>
    %5 = vector.shape_cast %4 : vector<1x256x128xbf16> to vector<256x128xbf16>
    %cst_6 = arith.constant dense<0.000000e+00> : vector<96x128xf32>
    %6 = tpu.matmul %3, %5, %cst_6 {dimension_numbers = #tpu.dot_dimension_numbers<[1], [0], [0], [1], [0, 0, 1, 1], [], []>} : vector<96x256xbf16>, vector<256x128xbf16>, vector<96x128xf32> -> vector<96x128xf32>
    %7 = arith.addf %0, %6 : vector<96x128xf32>
    %c0_7 = arith.constant 0 : index
    %c0_8 = arith.constant 0 : index
    %8 = vector.load %arg4[%c0_7, %c0_8] : memref<1x128xf32, #tpu.memory_space<vmem>>, vector<1x128xf32>
    %9 = vector.broadcast %8 : vector<1x128xf32> to vector<96x128xf32>
    %10 = arith.addf %7, %9 : vector<96x128xf32>
    %cst_9 = arith.constant 0.000000e+00 : f32
    %11 = vector.broadcast %cst_9 : f32 to vector<96x128xf32>
    %12 = arith.maximumf %10, %11 : vector<96x128xf32>
    %13 = arith.truncf %12 : vector<96x128xf32> to vector<96x128xbf16>
    %c0_10 = arith.constant 0 : index
    %c0_11 = arith.constant 0 : index
    %14 = vector.load %arg5[%c0_10, %c0_11] : memref<128x128xbf16, #tpu.memory_space<vmem>>, vector<128x128xbf16>
    %cst_12 = arith.constant dense<0.000000e+00> : vector<96x128xf32>
    %15 = tpu.matmul %13, %14, %cst_12 {dimension_numbers = #tpu.dot_dimension_numbers<[1], [0], [0], [1], [0, 0, 1, 1], [], []>} : vector<96x128xbf16>, vector<128x128xbf16>, vector<96x128xf32> -> vector<96x128xf32>
    %c0_13 = arith.constant 0 : index
    %c0_14 = arith.constant 0 : index
    %16 = vector.load %arg6[%c0_13, %c0_14] : memref<1x128xf32, #tpu.memory_space<vmem>>, vector<1x128xf32>
    %17 = vector.broadcast %16 : vector<1x128xf32> to vector<96x128xf32>
    %18 = arith.addf %15, %17 : vector<96x128xf32>
    %cst_15 = arith.constant 0.000000e+00 : f32
    %19 = vector.broadcast %cst_15 : f32 to vector<96x128xf32>
    %20 = arith.maximumf %18, %19 : vector<96x128xf32>
    %21 = arith.truncf %20 : vector<96x128xf32> to vector<96x128xbf16>
    %c0_16 = arith.constant 0 : index
    %c0_17 = arith.constant 0 : index
    %22 = vector.load %arg7[%c0_16, %c0_17] : memref<128x128xbf16, #tpu.memory_space<vmem>>, vector<128x128xbf16>
    %cst_18 = arith.constant dense<0.000000e+00> : vector<96x128xf32>
    %23 = tpu.matmul %21, %22, %cst_18 {dimension_numbers = #tpu.dot_dimension_numbers<[1], [0], [0], [1], [0, 0, 1, 1], [], []>} : vector<96x128xbf16>, vector<128x128xbf16>, vector<96x128xf32> -> vector<96x128xf32>
    %c0_19 = arith.constant 0 : index
    %c0_20 = arith.constant 0 : index
    %24 = vector.load %arg8[%c0_19, %c0_20] : memref<1x128xf32, #tpu.memory_space<vmem>>, vector<1x128xf32>
    %25 = vector.broadcast %24 : vector<1x128xf32> to vector<96x128xf32>
    %26 = arith.addf %23, %25 : vector<96x128xf32>
    %cst_21 = arith.constant 0.000000e+00 : f32
    %27 = vector.broadcast %cst_21 : f32 to vector<96x128xf32>
    %28 = arith.maximumf %26, %27 : vector<96x128xf32>
    %29 = arith.truncf %28 : vector<96x128xf32> to vector<96x128xbf16>
    %c0_22 = arith.constant 0 : index
    %c0_23 = arith.constant 0 : index
    %30 = vector.load %arg9[%c0_22, %c0_23] : memref<128x8xbf16, #tpu.memory_space<vmem>>, vector<128x8xbf16>
    %cst_24 = arith.constant dense<0.000000e+00> : vector<96x8xf32>
    %31 = tpu.matmul %29, %30, %cst_24 {dimension_numbers = #tpu.dot_dimension_numbers<[1], [0], [0], [1], [0, 0, 1, 1], [], []>} : vector<96x128xbf16>, vector<128x8xbf16>, vector<96x8xf32> -> vector<96x8xf32>
    %c0_25 = arith.constant 0 : index
    %c0_26 = arith.constant 0 : index
    %32 = vector.load %arg10[%c0_25, %c0_26] : memref<1x8xf32, #tpu.memory_space<vmem>>, vector<1x8xf32>
    %33 = vector.broadcast %32 : vector<1x8xf32> to vector<96x8xf32>
    %34 = arith.addf %31, %33 : vector<96x8xf32>
    %35 = arith.negf %34 : vector<96x8xf32>
    %36 = math.exp %35 : vector<96x8xf32>
    %cst_27 = arith.constant 1.000000e+00 : f32
    %37 = vector.broadcast %cst_27 : f32 to vector<96x8xf32>
    %38 = arith.addf %37, %36 : vector<96x8xf32>
    %39 = arith.divf %37, %38 : vector<96x8xf32>
    %c0_28 = arith.constant 0 : index
    %c0_29 = arith.constant 0 : index
    %c0_30 = arith.constant 0 : index
    %40 = vector.load %arg11[%c0_28, %c0_29, %c0_30] : memref<1x96x8xf32, #tpu.memory_space<vmem>>, vector<1x96x8xf32>
    %41 = vector.shape_cast %40 : vector<1x96x8xf32> to vector<96x8xf32>
    %42 = vector.shape_cast %39 : vector<96x8xf32> to vector<1x96x8xf32>
    tpu.vector_store %arg11[%c0_28, %c0_29, %c0_30], %42 {strides = array<i32>} : memref<1x96x8xf32, #tpu.memory_space<vmem>>, vector<1x96x8xf32>,
    return
  }
  func.func @transform_0(%arg0: i32, %arg1: i32) -> (i32, i32, i32, i32) {
    %c0_i32 = arith.constant 0 : i32
    %c0_i32_0 = arith.constant 0 : i32
    %c0_i32_1 = arith.constant 0 : i32
    return %arg0, %c0_i32, %arg1, %c0_i32_0 : i32, i32, i32, i32
  }
  func.func @transform_1(%arg0: i32, %arg1: i32) -> (i32, i32, i32) {
    %c0_i32 = arith.constant 0 : i32
    %c0_i32_0 = arith.constant 0 : i32
    %c0_i32_1 = arith.constant 0 : i32
    %c0_i32_2 = arith.constant 0 : i32
    return %c0_i32, %c0_i32_0, %c0_i32_1 : i32, i32, i32
  }
  func.func @transform_2(%arg0: i32, %arg1: i32) -> (i32, i32) {
    %c0_i32 = arith.constant 0 : i32
    %c0_i32_0 = arith.constant 0 : i32
    %c0_i32_1 = arith.constant 0 : i32
    return %c0_i32, %c0_i32_0 : i32, i32
  }
  func.func @transform_3(%arg0: i32, %arg1: i32) -> (i32, i32) {
    %c0_i32 = arith.constant 0 : i32
    %c0_i32_0 = arith.constant 0 : i32
    %c0_i32_1 = arith.constant 0 : i32
    return %c0_i32, %c0_i32_0 : i32, i32
  }
  func.func @transform_4(%arg0: i32, %arg1: i32) -> (i32, i32) {
    %c0_i32 = arith.constant 0 : i32
    %c0_i32_0 = arith.constant 0 : i32
    %c0_i32_1 = arith.constant 0 : i32
    return %c0_i32, %c0_i32_0 : i32, i32
  }
  func.func @transform_5(%arg0: i32, %arg1: i32) -> (i32, i32) {
    %c0_i32 = arith.constant 0 : i32
    %c0_i32_0 = arith.constant 0 : i32
    %c0_i32_1 = arith.constant 0 : i32
    return %c0_i32, %c0_i32_0 : i32, i32
  }
  func.func @transform_6(%arg0: i32, %arg1: i32) -> (i32, i32) {
    %c0_i32 = arith.constant 0 : i32
    %c0_i32_0 = arith.constant 0 : i32
    %c0_i32_1 = arith.constant 0 : i32
    return %c0_i32, %c0_i32_0 : i32, i32
  }
  func.func @transform_7(%arg0: i32, %arg1: i32) -> (i32, i32) {
    %c0_i32 = arith.constant 0 : i32
    %c0_i32_0 = arith.constant 0 : i32
    %c0_i32_1 = arith.constant 0 : i32
    return %c0_i32, %c0_i32_0 : i32, i32
  }
  func.func @transform_8(%arg0: i32, %arg1: i32) -> (i32, i32) {
    %c0_i32 = arith.constant 0 : i32
    %c0_i32_0 = arith.constant 0 : i32
    %c0_i32_1 = arith.constant 0 : i32
    return %c0_i32, %c0_i32_0 : i32, i32
  }
  func.func @transform_9(%arg0: i32, %arg1: i32) -> (i32, i32, i32) {
    %c0_i32 = arith.constant 0 : i32
    %c0_i32_0 = arith.constant 0 : i32
    return %arg0, %arg1, %c0_i32 : i32, i32, i32
  }
}

</mosaic_0001>

<llo_original>
// kernel: tpu_custom_call.1
$region0: #{tpu_custom_call.1}
  #allocation0 [shape = 'u32[]', space=smem, size = 0x4, offset = 0x4, fixed_abs, tag = 'smem constant byte address 0x4 - core index']
  #allocation1 [shape = 'u32[144,128]{1,0:T(1,128)}', space=vmem, size = 0x12000, scoped, tag = 'internal scratch']
  %s0 = inlined_call_operand.hbm [shape: f32[2,1,96,256], index: 0, kind: input, shape index: {}]
  %s1 = inlined_call_operand.hbm [shape: bf16[1,256,128], index: 1, kind: input, shape index: {}]
  %s2 = inlined_call_operand.vmem [shape: f32[1,128], index: 2, kind: input, shape index: {}]
  %s3 = inlined_call_operand.vmem [shape: bf16[128,128], index: 3, kind: input, shape index: {}]
  %s4 = inlined_call_operand.vmem [shape: f32[1,128], index: 4, kind: input, shape index: {}]
  %s5 = inlined_call_operand.hbm [shape: bf16[128,128], index: 5, kind: input, shape index: {}]
  %s6 = inlined_call_operand.vmem [shape: f32[1,128], index: 6, kind: input, shape index: {}]
  %s7 = inlined_call_operand.vmem [shape: bf16[128,8], index: 7, kind: input, shape index: {}]
  %s8 = inlined_call_operand.vmem [shape: f32[1,8], index: 8, kind: input, shape index: {}]
  %s9 = inlined_call_operand.vmem [shape: f32[2,96,8], index: 9, kind: output, shape index: {}]
  %s10 = sld [smem:[#allocation0]]
  $region81: #{tpu_custom_call.1} parent=0
    _
  %s12 = ssub.s32 1, %s10
  %s13 = scalar_select 0, %s12, %s10
  $region1: #{tpu_custom_call.1} parent=0
    #allocation2 [shape = 'u8[196608]{0}', space=vmem, size = 0x30000, scoped, tag = 'input window, operand 0']
    #allocation3 [shape = 's32[2]{0}', space=sflag, size = 0x8, scoped, tag = 'scoped memory for tpu_custom_call.1']
    #allocation4 [shape = 'u8[65536]{0}', space=vmem, size = 0x10000, scoped, tag = 'input window, operand 1, single buffered']
    #allocation5 [shape = 's32[1]{0}', space=sflag, size = 0x4, scoped, tag = 'scoped memory for tpu_custom_call.1']
    #allocation6 [shape = 'u8[32768]{0}', space=vmem, size = 0x8000, scoped, tag = 'input window, operand 5, single buffered']
    %14 = vsyncpa [#allocation3], 0
    %s15 = scalar_lea.sflag [#allocation3], 1
    %16 = vsyncpa %s15, 0
    %17 = vsyncpa [#allocation5], 0
    loop: start=0, step=1, limit=4
    $region2: #{tpu_custom_call.1} parent=1 // loop_pre_header
      _
    $region3: #{tpu_custom_call.1} parent=1 // loop_header
      %s19 = sphi 0, %s23
      %p20 = scmp.ge.s32.totalorder %s19, 4
      %s26 = sphi 0, %s38
      %s27 = sphi 0, %s34
      %s28 = sphi 0, %s26
      %s29 = sphi 0, %s27
      %s30 = sphi 0, %s28
      %s31 = sphi 0, %s29
      %s43 = sphi 0, %s45
      %s46 = sphi 0, %s43
      %s47 = sphi 0, %s46
      %s63 = sphi 0, %s47
      %s67 = sphi 0, %s67
      %s69 = sphi 0, %s67
      %s70 = sphi 0, %s69
      %s84 = sphi 0, %s70
      %s88 = sphi 0, %s88
      %s90 = sphi 0, %s88
      %s91 = sphi 0, %s90
      %s105 = sphi 0, %s91
      %s109 = sphi 0, %s109
      %s111 = sphi 0, %s109
      %s112 = sphi 0, %s111
      %s126 = sphi 0, %s112
      %s130 = sphi 0, %s130
      %s132 = sphi 0, %s130
      %s133 = sphi 0, %s132
      %s147 = sphi 0, %s133
      %s151 = sphi 0, %s151
      %s153 = sphi 0, %s151
      %s154 = sphi 0, %s153
      %s168 = sphi 0, %s154
      %s172 = sphi 0, %s172
      %s174 = sphi 0, %s172
      %s175 = sphi 0, %s174
      %s189 = sphi 0, %s175
      %s193 = sphi 0, %s193
      %s195 = sphi 0, %s193
      %s196 = sphi 0, %s195
      %s210 = sphi 0, %s196
      %s214 = sphi 0, %s214
      %s216 = sphi 0, %s214
      %s217 = sphi 0, %s216
      %s231 = sphi 0, %s217
      %s239 = sphi 0, %s241
      %s242 = sphi 0, %s239
      %s243 = sphi 0, %s242
      %s259 = sphi 0, %s243
    $region4: #{tpu_custom_call.1} parent=1 // loop_header_branch
      %22 = sbr.rel (%p20) target = $region8
    $region5: #{tpu_custom_call.1} parent=1 // loop_body
      %s24 = ssub.s32 %s19, 1
      %s25 = ssub.s32 %s19, 2
      %s32 = sadd.s32 1, %s27
      %p33 = scmp.ge.s32.totalorder %s32, 1
      %s34 = scalar_select %p33, 0, %s32
      %s35 = sadd.s32 1, %s26
      %s36 = scalar_select %p33, %s35, %s26
      %p37 = scmp.ge.s32.totalorder %s36, 2
      %s38 = scalar_select %p37, 0, %s36
      %s39 = ssub.s32 %s26, %s38
      %s40 = ssub.s32 %s27, %s34
      %s41 = sor.u32 %s39, %s40
      %p42 = scmp.eq.s32.totalorder %s41, 0
      %s44 = sadd.s32 %s43, 1
      %s45 = scalar_select %p42, %s43, %s44
      %p48 = pneg %p42
      %p49 = scmp.eq.s32.totalorder %s19, 1
      %p50 = por %p48, %p49
      %p51 = scmp.ne.s32.totalorder %s43, %s46
      %p52 = scmp.eq.s32.totalorder %s19, 0
      %p53 = por %p51, %p52
      %p54 = scmp.ne.s32.totalorder %s43, %s46
      %p55 = scmp.eq.s32.totalorder %s24, 1
      %p56 = por %p54, %p55
      %p57 = scmp.ne.s32.totalorder %s46, %s47
      %p58 = scmp.eq.s32.totalorder %s24, 0
      %p59 = por %p57, %p58
      %p60 = scmp.ne.s32.totalorder %s46, %s47
      %p61 = scmp.eq.s32.totalorder %s25, 1
      %p62 = por %p60, %p61
      %p64 = scmp.ne.s32.totalorder %s47, %s63
      %p65 = scmp.eq.s32.totalorder %s25, 0
      %p66 = por %p64, %p65
      %s68 = sadd.s32 %s67, 1
      %p71 = scmp.eq.s32.totalorder %s19, 1
      %p72 = scmp.ne.s32.totalorder %s67, %s69
      %p73 = scmp.eq.s32.totalorder %s19, 0
      %p74 = por %p72, %p73
      %p75 = scmp.ne.s32.totalorder %s67, %s69
      %p76 = scmp.eq.s32.totalorder %s24, 1
      %p77 = por %p75, %p76
      %p78 = scmp.ne.s32.totalorder %s69, %s70
      %p79 = scmp.eq.s32.totalorder %s24, 0
      %p80 = por %p78, %p79
      %p81 = scmp.ne.s32.totalorder %s69, %s70
      %p82 = scmp.eq.s32.totalorder %s25, 1
      %p83 = por %p81, %p82
      %p85 = scmp.ne.s32.totalorder %s70, %s84
      %p86 = scmp.eq.s32.totalorder %s25, 0
      %p87 = por %p85, %p86
      %s89 = sadd.s32 %s88, 1
      %p92 = scmp.eq.s32.totalorder %s19, 1
      %p93 = scmp.ne.s32.totalorder %s88, %s90
      %p94 = scmp.eq.s32.totalorder %s19, 0
      %p95 = por %p93, %p94
      %p96 = scmp.ne.s32.totalorder %s88, %s90
      %p97 = scmp.eq.s32.totalorder %s24, 1
      %p98 = por %p96, %p97
      %p99 = scmp.ne.s32.totalorder %s90, %s91
      %p100 = scmp.eq.s32.totalorder %s24, 0
      %p101 = por %p99, %p100
      %p102 = scmp.ne.s32.totalorder %s90, %s91
      %p103 = scmp.eq.s32.totalorder %s25, 1
      %p104 = por %p102, %p103
      %p106 = scmp.ne.s32.totalorder %s91, %s105
      %p107 = scmp.eq.s32.totalorder %s25, 0
      %p108 = por %p106, %p107
      %s110 = sadd.s32 %s109, 1
      %p113 = scmp.eq.s32.totalorder %s19, 1
      %p114 = scmp.ne.s32.totalorder %s109, %s111
      %p115 = scmp.eq.s32.totalorder %s19, 0
      %p116 = por %p114, %p115
      %p117 = scmp.ne.s32.totalorder %s109, %s111
      %p118 = scmp.eq.s32.totalorder %s24, 1
      %p119 = por %p117, %p118
      %p120 = scmp.ne.s32.totalorder %s111, %s112
      %p121 = scmp.eq.s32.totalorder %s24, 0
      %p122 = por %p120, %p121
      %p123 = scmp.ne.s32.totalorder %s111, %s112
      %p124 = scmp.eq.s32.totalorder %s25, 1
      %p125 = por %p123, %p124
      %p127 = scmp.ne.s32.totalorder %s112, %s126
      %p128 = scmp.eq.s32.totalorder %s25, 0
      %p129 = por %p127, %p128
      %s131 = sadd.s32 %s130, 1
      %p134 = scmp.eq.s32.totalorder %s19, 1
      %p135 = scmp.ne.s32.totalorder %s130, %s132
      %p136 = scmp.eq.s32.totalorder %s19, 0
      %p137 = por %p135, %p136
      %p138 = scmp.ne.s32.totalorder %s130, %s132
      %p139 = scmp.eq.s32.totalorder %s24, 1
      %p140 = por %p138, %p139
      %p141 = scmp.ne.s32.totalorder %s132, %s133
      %p142 = scmp.eq.s32.totalorder %s24, 0
      %p143 = por %p141, %p142
      %p144 = scmp.ne.s32.totalorder %s132, %s133
      %p145 = scmp.eq.s32.totalorder %s25, 1
      %p146 = por %p144, %p145
      %p148 = scmp.ne.s32.totalorder %s133, %s147
      %p149 = scmp.eq.s32.totalorder %s25, 0
      %p150 = por %p148, %p149
      %s152 = sadd.s32 %s151, 1
      %p155 = scmp.eq.s32.totalorder %s19, 1
      %p156 = scmp.ne.s32.totalorder %s151, %s153
      %p157 = scmp.eq.s32.totalorder %s19, 0
      %p158 = por %p156, %p157
      %p159 = scmp.ne.s32.totalorder %s151, %s153
      %p160 = scmp.eq.s32.totalorder %s24, 1
      %p161 = por %p159, %p160
      %p162 = scmp.ne.s32.totalorder %s153, %s154
      %p163 = scmp.eq.s32.totalorder %s24, 0
      %p164 = por %p162, %p163
      %p165 = scmp.ne.s32.totalorder %s153, %s154
      %p166 = scmp.eq.s32.totalorder %s25, 1
      %p167 = por %p165, %p166
      %p169 = scmp.ne.s32.totalorder %s154, %s168
      %p170 = scmp.eq.s32.totalorder %s25, 0
      %p171 = por %p169, %p170
      %s173 = sadd.s32 %s172, 1
      %p176 = scmp.eq.s32.totalorder %s19, 1
      %p177 = scmp.ne.s32.totalorder %s172, %s174
      %p178 = scmp.eq.s32.totalorder %s19, 0
      %p179 = por %p177, %p178
      %p180 = scmp.ne.s32.totalorder %s172, %s174
      %p181 = scmp.eq.s32.totalorder %s24, 1
      %p182 = por %p180, %p181
      %p183 = scmp.ne.s32.totalorder %s174, %s175
      %p184 = scmp.eq.s32.totalorder %s24, 0
      %p185 = por %p183, %p184
      %p186 = scmp.ne.s32.totalorder %s174, %s175
      %p187 = scmp.eq.s32.totalorder %s25, 1
      %p188 = por %p186, %p187
      %p190 = scmp.ne.s32.totalorder %s175, %s189
      %p191 = scmp.eq.s32.totalorder %s25, 0
      %p192 = por %p190, %p191
      %s194 = sadd.s32 %s193, 1
      %p197 = scmp.eq.s32.totalorder %s19, 1
      %p198 = scmp.ne.s32.totalorder %s193, %s195
      %p199 = scmp.eq.s32.totalorder %s19, 0
      %p200 = por %p198, %p199
      %p201 = scmp.ne.s32.totalorder %s193, %s195
      %p202 = scmp.eq.s32.totalorder %s24, 1
      %p203 = por %p201, %p202
      %p204 = scmp.ne.s32.totalorder %s195, %s196
      %p205 = scmp.eq.s32.totalorder %s24, 0
      %p206 = por %p204, %p205
      %p207 = scmp.ne.s32.totalorder %s195, %s196
      %p208 = scmp.eq.s32.totalorder %s25, 1
      %p209 = por %p207, %p208
      %p211 = scmp.ne.s32.totalorder %s196, %s210
      %p212 = scmp.eq.s32.totalorder %s25, 0
      %p213 = por %p211, %p212
      %s215 = sadd.s32 %s214, 1
      %p218 = scmp.eq.s32.totalorder %s19, 1
      %p219 = scmp.ne.s32.totalorder %s214, %s216
      %p220 = scmp.eq.s32.totalorder %s19, 0
      %p221 = por %p219, %p220
      %p222 = scmp.ne.s32.totalorder %s214, %s216
      %p223 = scmp.eq.s32.totalorder %s24, 1
      %p224 = por %p222, %p223
      %p225 = scmp.ne.s32.totalorder %s216, %s217
      %p226 = scmp.eq.s32.totalorder %s24, 0
      %p227 = por %p225, %p226
      %p228 = scmp.ne.s32.totalorder %s216, %s217
      %p229 = scmp.eq.s32.totalorder %s25, 1
      %p230 = por %p228, %p229
      %p232 = scmp.ne.s32.totalorder %s217, %s231
      %p233 = scmp.eq.s32.totalorder %s25, 0
      %p234 = por %p232, %p233
      %s235 = ssub.s32 %s26, %s38
      %s236 = ssub.s32 %s27, %s34
      %s237 = sor.u32 %s235, %s236
      %p238 = scmp.eq.s32.totalorder %s237, 0
      %s240 = sadd.s32 %s239, 1
      %s241 = scalar_select %p238, %s239, %s240
      %p244 = pneg %p238
      %p245 = scmp.eq.s32.totalorder %s19, 1
      %p246 = por %p244, %p245
      %p247 = scmp.ne.s32.totalorder %s239, %s242
      %p248 = scmp.eq.s32.totalorder %s19, 0
      %p249 = por %p247, %p248
      %p250 = scmp.ne.s32.totalorder %s239, %s242
      %p251 = scmp.eq.s32.totalorder %s24, 1
      %p252 = por %p250, %p251
      %p253 = scmp.ne.s32.totalorder %s242, %s243
      %p254 = scmp.eq.s32.totalorder %s24, 0
      %p255 = por %p253, %p254
      %p256 = scmp.ne.s32.totalorder %s242, %s243
      %p257 = scmp.eq.s32.totalorder %s25, 1
      %p258 = por %p256, %p257
      %p260 = scmp.ne.s32.totalorder %s243, %s259
      %p261 = scmp.eq.s32.totalorder %s25, 0
      %p262 = por %p260, %p261
      %p263 = scmp.le.s32.totalorder 1, %s19
      %p264 = scmp.lt.s32.totalorder %s19, 3
      %p265 = pnand %p263, %p264
      %p266 = pneg %p265
      // Predicated region
      $region9: #{tpu_custom_call.1} parent=5 // pred_check
        _
      $region10: #{tpu_custom_call.1} parent=5 // pred_check_branch
        %268 = sbr.rel (%p265) target = $region12
      $region11: #{tpu_custom_call.1} parent=5 // pred_region
        %s269 = ssub.s32 %s19, 1
        // Predicated region
        $region13: #{tpu_custom_call.1} parent=11 // pred_check
          %p270 = pneg %p80
        $region14: #{tpu_custom_call.1} parent=11 // pred_check_branch
          %272 = sbr.rel (%p270) target = $region16
        $region15: #{tpu_custom_call.1} parent=11 // pred_region
          %s274 = ssub.s32 2048, 2048
          %275 = vsyncadd [#allocation5], %s274
          %s276 = sshll.u32 [#allocation4], 4
          %s277 = int_to_ptr.vmem [resolvable:$true] %s276
          %282 = dma.hbm_to_vmem [thread:$0]  %s1, 2048, %s277, [#allocation5], 64, 64, 4
        $region16: #{tpu_custom_call.1} parent=11 // pred_fallthru
          _
        // Predicated region
        $region17: #{tpu_custom_call.1} parent=11 // pred_check
          %p283 = pneg %p101
        $region18: #{tpu_custom_call.1} parent=11 // pred_check_branch
          %285 = sbr.rel (%p283) target = $region20
        $region19: #{tpu_custom_call.1} parent=11 // pred_region
          _
        $region20: #{tpu_custom_call.1} parent=11 // pred_fallthru
          _
        // Predicated region
        $region21: #{tpu_custom_call.1} parent=11 // pred_check
          %p286 = pneg %p122
        $region22: #{tpu_custom_call.1} parent=11 // pred_check_branch
          %288 = sbr.rel (%p286) target = $region24
        $region23: #{tpu_custom_call.1} parent=11 // pred_region
          _
        $region24: #{tpu_custom_call.1} parent=11 // pred_fallthru
          _
        // Predicated region
        $region25: #{tpu_custom_call.1} parent=11 // pred_check
          %p289 = pneg %p143
        $region26: #{tpu_custom_call.1} parent=11 // pred_check_branch
          %291 = sbr.rel (%p289) target = $region28
        $region27: #{tpu_custom_call.1} parent=11 // pred_region
          _
        $region28: #{tpu_custom_call.1} parent=11 // pred_fallthru
          _
        // Predicated region
        $region29: #{tpu_custom_call.1} parent=11 // pred_check
          %p292 = pneg %p164
        $region30: #{tpu_custom_call.1} parent=11 // pred_check_branch
          %294 = sbr.rel (%p292) target = $region32
        $region31: #{tpu_custom_call.1} parent=11 // pred_region
          %s296 = ssub.s32 1024, 1024
          %297 = vsyncadd [#allocation5], %s296
          %s298 = sshll.u32 [#allocation6], 4
          %s299 = int_to_ptr.vmem [resolvable:$true] %s298
          %304 = dma.hbm_to_vmem [thread:$0]  %s5, 1024, %s299, [#allocation5], 64, 64, 4
        $region32: #{tpu_custom_call.1} parent=11 // pred_fallthru
          _
        // Predicated region
        $region33: #{tpu_custom_call.1} parent=11 // pred_check
          %p305 = pneg %p185
        $region34: #{tpu_custom_call.1} parent=11 // pred_check_branch
          %307 = sbr.rel (%p305) target = $region36
        $region35: #{tpu_custom_call.1} parent=11 // pred_region
          _
        $region36: #{tpu_custom_call.1} parent=11 // pred_fallthru
          _
        // Predicated region
        $region37: #{tpu_custom_call.1} parent=11 // pred_check
          %p308 = pneg %p206
        $region38: #{tpu_custom_call.1} parent=11 // pred_check_branch
          %310 = sbr.rel (%p308) target = $region40
        $region39: #{tpu_custom_call.1} parent=11 // pred_region
          _
        $region40: #{tpu_custom_call.1} parent=11 // pred_fallthru
          _
        // Predicated region
        $region41: #{tpu_custom_call.1} parent=11 // pred_check
          %p311 = pneg %p227
        $region42: #{tpu_custom_call.1} parent=11 // pred_check_branch
          %313 = sbr.rel (%p311) target = $region44
        $region43: #{tpu_custom_call.1} parent=11 // pred_region
          _
        $region44: #{tpu_custom_call.1} parent=11 // pred_fallthru
          _
      $region12: #{tpu_custom_call.1} parent=5 // pred_fallthru
        _
      %p314 = scmp.lt.s32.totalorder %s19, 2
      // Predicated region
      $region45: #{tpu_custom_call.1} parent=5 // pred_check
        %p315 = pneg %p314
      $region46: #{tpu_custom_call.1} parent=5 // pred_check_branch
        %317 = sbr.rel (%p315) target = $region48
      $region47: #{tpu_custom_call.1} parent=5 // pred_region
        // Predicated region
        $region49: #{tpu_custom_call.1} parent=47 // pred_check
          %p318 = pneg %p53
        $region50: #{tpu_custom_call.1} parent=47 // pred_check_branch
          %320 = sbr.rel (%p318) target = $region52
        $region51: #{tpu_custom_call.1} parent=47 // pred_region
          %s321 = sand.u32 %s43, 1
          %s322 = scalar_lea.sflag [#allocation3], %s321
          %s323 = sand.u32 %s43, 1
          %s324 = smul.addr %s323, 192
          %s325 = scalar_lea.vmem [#allocation2], %s324
          %s326 = smul.u32 12, %s27
          %s328 = ssub.s32 3072, 3072
          %329 = vsyncadd %s322, %s328
          %s330 = smul.addr %s326, 2
          %s331 = smul.addr %s26, 24
          %s332 = sadd.s32 %s330, %s331
          %s333 = smul.addr %s332, 128
          %s334 = scalar_lea.hbm %s0, %s333
          %s335 = sshll.u32 %s325, 4
          %s336 = int_to_ptr.vmem [resolvable:$true] %s335
          %341 = dma.hbm_to_vmem [thread:$0]  %s334, 3072, %s336, %s322, 256, 256, 16
        $region52: #{tpu_custom_call.1} parent=47 // pred_fallthru
          _
      $region48: #{tpu_custom_call.1} parent=5 // pred_fallthru
        _
      %p342 = scmp.le.s32.totalorder 1, %s19
      %p343 = scmp.lt.s32.totalorder %s19, 3
      %p344 = pnand %p342, %p343
      %p345 = pneg %p344
      // Predicated region
      $region53: #{tpu_custom_call.1} parent=5 // pred_check
        _
      $region54: #{tpu_custom_call.1} parent=5 // pred_check_branch
        %347 = sbr.rel (%p344) target = $region56
      $region55: #{tpu_custom_call.1} parent=5 // pred_region
        %s348 = ssub.s32 %s19, 1
        %s349 = sand.u32 %s46, 1
        %s350 = scalar_lea.sflag [#allocation3], %s349
        %s351 = sand.u32 %s46, 1
        %s352 = smul.addr %s351, 192
        %s353 = scalar_lea.vmem [#allocation2], %s352
        // Predicated region
        $region57: #{tpu_custom_call.1} parent=55 // pred_check
          %p354 = pneg %p59
        $region58: #{tpu_custom_call.1} parent=55 // pred_check_branch
          %356 = sbr.rel (%p354) target = $region60
        $region59: #{tpu_custom_call.1} parent=55 // pred_region
          %357 = dma.done %s350, 3072
        $region60: #{tpu_custom_call.1} parent=55 // pred_fallthru
          _
        // Predicated region
        $region61: #{tpu_custom_call.1} parent=55 // pred_check
          %p358 = pneg %p80
        $region62: #{tpu_custom_call.1} parent=55 // pred_check_branch
          %360 = sbr.rel (%p358) target = $region64
        $region63: #{tpu_custom_call.1} parent=55 // pred_region
          %361 = dma.done [#allocation5], 2048
        $region64: #{tpu_custom_call.1} parent=55 // pred_fallthru
          _
        // Predicated region
        $region65: #{tpu_custom_call.1} parent=55 // pred_check
          %p362 = pneg %p164
        $region66: #{tpu_custom_call.1} parent=55 // pred_check_branch
          %364 = sbr.rel (%p362) target = $region68
        $region67: #{tpu_custom_call.1} parent=55 // pred_region
          %365 = dma.done [#allocation5], 1024
        $region68: #{tpu_custom_call.1} parent=55 // pred_fallthru
          _
        %s366 = sand.u32 %s46, 1
        %s367 = scalar_lea.sflag [#allocation3], %s366
        %s368 = sand.u32 %s46, 1
        %s369 = smul.addr %s368, 192
        %s370 = scalar_lea.vmem [#allocation2], %s369
        %p371 = pneg %p59
        %p372 = pneg %p56
        %p373 = pneg %p80
        %p374 = pneg %p77
        %p375 = pneg %p101
        %p376 = pneg %p98
        %p377 = pneg %p122
        %p378 = pneg %p119
        %p379 = pneg %p143
        %p380 = pneg %p140
        %p381 = pneg %p164
        %p382 = pneg %p161
        %p383 = pneg %p185
        %p384 = pneg %p182
        %p385 = pneg %p206
        %p386 = pneg %p203
        %p387 = pneg %p227
        %p388 = pneg %p224
        %p389 = pneg %p255
        %p390 = pneg %p252
        %s391 = smul.u32 12, %s29
        %p392 = scmp.lt.s32.totalorder %s28, 1
        %s393 = scalar_select %p392, %s28, 1
        %p394 = scmp.lt.s32.totalorder %s391, 11
        %s395 = scalar_select %p394, %s391, 11
        %s396 = smul.addr %s393, 12
        %s397 = sadd.s32 %s395, %s396
        %s398 = smul.addr %s397, 8
        %s399 = scalar_lea.vmem %s9, %s398
        %s400 = smul.u32 12, %s29
        %s401 = smul.u32 12, %s29
        %p402 = scmp.lt.s32.totalorder %s28, 1
        %s403 = scalar_select %p402, %s28, 1
        %p404 = scmp.lt.s32.totalorder %s401, 11
        %s405 = scalar_select %p404, %s401, 11
        %s406 = smul.addr %s403, 12
        %s407 = sadd.s32 %s405, %s406
        %s408 = smul.addr %s407, 8
        %s409 = scalar_lea.vmem %s9, %s408
        %s410 = smul.u32 12, %s29
        %v412 = vld [vmem:[%s353] sm:$0xff]
        %v413 = vld [vmem:[%s353 + $0x8] sm:$0xff]
        %v414 = vld [vmem:[%s353 + $0x10] sm:$0xff]
        %v415 = vld [vmem:[%s353 + $0x18] sm:$0xff]
        %v416 = vld [vmem:[%s353 + $0x20] sm:$0xff]
        %v417 = vld [vmem:[%s353 + $0x28] sm:$0xff]
        %v418 = vld [vmem:[%s353 + $0x30] sm:$0xff]
        %v419 = vld [vmem:[%s353 + $0x38] sm:$0xff]
        %v420 = vld [vmem:[%s353 + $0x40] sm:$0xff]
        %v421 = vld [vmem:[%s353 + $0x48] sm:$0xff]
        %v422 = vld [vmem:[%s353 + $0x50] sm:$0xff]
        %v423 = vld [vmem:[%s353 + $0x58] sm:$0xff]
        %v424 = vld [vmem:[%s353 + $0x60] sm:$0xff]
        %v425 = vld [vmem:[%s353 + $0x68] sm:$0xff]
        %v426 = vld [vmem:[%s353 + $0x70] sm:$0xff]
        %v427 = vld [vmem:[%s353 + $0x78] sm:$0xff]
        %v428 = vld [vmem:[%s353 + $0x80] sm:$0xff]
        %v429 = vld [vmem:[%s353 + $0x88] sm:$0xff]
        %v430 = vld [vmem:[%s353 + $0x90] sm:$0xff]
        %v431 = vld [vmem:[%s353 + $0x98] sm:$0xff]
        %v432 = vld [vmem:[%s353 + $0xa0] sm:$0xff]
        %v433 = vld [vmem:[%s353 + $0xa8] sm:$0xff]
        %v434 = vld [vmem:[%s353 + $0xb0] sm:$0xff]
        %v435 = vld [vmem:[%s353 + $0xb8] sm:$0xff]
        %v436 = vpack.c.bf16 %v414, %v412
        %v437 = vpack.c.bf16 %v415, %v413
        %v438 = vpack.c.bf16 %v418, %v416
        %v439 = vpack.c.bf16 %v419, %v417
        %v440 = vpack.c.bf16 %v422, %v420
        %v441 = vpack.c.bf16 %v423, %v421
        %v442 = vpack.c.bf16 %v426, %v424
        %v443 = vpack.c.bf16 %v427, %v425
        %v444 = vpack.c.bf16 %v430, %v428
        %v445 = vpack.c.bf16 %v431, %v429
        %v446 = vpack.c.bf16 %v434, %v432
        %v447 = vpack.c.bf16 %v435, %v433
        %v448 = vld [vmem:[#allocation4] sm:$0xf]
        %v449 = vld [vmem:[#allocation4 + $0x4] sm:$0xf]
        %v450 = vld [vmem:[#allocation4 + $0x8] sm:$0xf]
        %v451 = vld [vmem:[#allocation4 + $0xc] sm:$0xf]
        %v452 = vld [vmem:[#allocation4 + $0x10] sm:$0xf]
        %v453 = vld [vmem:[#allocation4 + $0x14] sm:$0xf]
        %v454 = vld [vmem:[#allocation4 + $0x18] sm:$0xf]
        %v455 = vld [vmem:[#allocation4 + $0x1c] sm:$0xf]
        %v456 = vld [vmem:[#allocation4 + $0x20] sm:$0xf]
        %v457 = vld [vmem:[#allocation4 + $0x24] sm:$0xf]
        %v458 = vld [vmem:[#allocation4 + $0x28] sm:$0xf]
        %v459 = vld [vmem:[#allocation4 + $0x2c] sm:$0xf]
        %v460 = vld [vmem:[#allocation4 + $0x30] sm:$0xf]
        %v461 = vld [vmem:[#allocation4 + $0x34] sm:$0xf]
        %v462 = vld [vmem:[#allocation4 + $0x38] sm:$0xf]
        %v463 = vld [vmem:[#allocation4 + $0x3c] sm:$0xf]
        %v464 = vld [vmem:[#allocation4 + $0x40] sm:$0xf]
        %v465 = vld [vmem:[#allocation4 + $0x44] sm:$0xf]
        %v466 = vld [vmem:[#allocation4 + $0x48] sm:$0xf]
        %v467 = vld [vmem:[#allocation4 + $0x4c] sm:$0xf]
        %v468 = vld [vmem:[#allocation4 + $0x50] sm:$0xf]
        %v469 = vld [vmem:[#allocation4 + $0x54] sm:$0xf]
        %v470 = vld [vmem:[#allocation4 + $0x58] sm:$0xf]
        %v471 = vld [vmem:[#allocation4 + $0x5c] sm:$0xf]
        %v472 = vld [vmem:[#allocation4 + $0x60] sm:$0xf]
        %v473 = vld [vmem:[#allocation4 + $0x64] sm:$0xf]
        %v474 = vld [vmem:[#allocation4 + $0x68] sm:$0xf]
        %v475 = vld [vmem:[#allocation4 + $0x6c] sm:$0xf]
        %v476 = vld [vmem:[#allocation4 + $0x70] sm:$0xf]
        %v477 = vld [vmem:[#allocation4 + $0x74] sm:$0xf]
        %v478 = vld [vmem:[#allocation4 + $0x78] sm:$0xf]
        %v479 = vld [vmem:[#allocation4 + $0x7c] sm:$0xf]
        %v480 = vld [vmem:[%s2] sm:$0x1]
        %v482 = vlaneseq
        %v483 = vshrl.u32 %v482, 7
        %v484 = vsub.s32 0, %v483
        %v485 = vrot.slane %v480, %v484
        %v519 = vunpack.c.l.b16 %v448
        %v520 = vunpack.c.l.b16 %v449
        %v521 = vunpack.c.l.b16 %v450
        %v522 = vunpack.c.l.b16 %v451
        %v523 = vunpack.c.l.b16 %v452
        %v524 = vunpack.c.l.b16 %v453
        %v525 = vunpack.c.l.b16 %v454
        %v526 = vunpack.c.l.b16 %v455
        %v527 = vunpack.c.l.b16 %v456
        %v528 = vunpack.c.l.b16 %v457
        %v529 = vunpack.c.l.b16 %v458
        %v530 = vunpack.c.l.b16 %v459
        %v531 = vunpack.c.l.b16 %v460
        %v532 = vunpack.c.l.b16 %v461
        %v533 = vunpack.c.l.b16 %v462
        %v534 = vunpack.c.l.b16 %v463
        %v535 = vunpack.c.l.b16 %v464
        %v536 = vunpack.c.l.b16 %v465
        %v537 = vunpack.c.l.b16 %v466
        %v538 = vunpack.c.l.b16 %v467
        %v539 = vunpack.c.l.b16 %v468
        %v540 = vunpack.c.l.b16 %v469
        %v541 = vunpack.c.l.b16 %v470
        %v542 = vunpack.c.l.b16 %v471
        %v543 = vunpack.c.l.b16 %v472
        %v544 = vunpack.c.l.b16 %v473
        %v545 = vunpack.c.l.b16 %v474
        %v546 = vunpack.c.l.b16 %v475
        %v547 = vunpack.c.l.b16 %v476
        %v548 = vunpack.c.l.b16 %v477
        %v549 = vunpack.c.l.b16 %v478
        %v550 = vunpack.c.l.b16 %v479
        %v551 = vpack.c.b16 %v520, %v519
        %v552 = vpack.c.b16 %v522, %v521
        %v553 = vpack.c.b16 %v524, %v523
        %v554 = vpack.c.b16 %v526, %v525
        %v555 = vpack.c.b16 %v528, %v527
        %v556 = vpack.c.b16 %v530, %v529
        %v557 = vpack.c.b16 %v532, %v531
        %v558 = vpack.c.b16 %v534, %v533
        %v559 = vpack.c.b16 %v536, %v535
        %v560 = vpack.c.b16 %v538, %v537
        %v561 = vpack.c.b16 %v540, %v539
        %v562 = vpack.c.b16 %v542, %v541
        %v563 = vpack.c.b16 %v544, %v543
        %v564 = vpack.c.b16 %v546, %v545
        %v565 = vpack.c.b16 %v548, %v547
        %v566 = vpack.c.b16 %v550, %v549
        %583 = vmatprep.subr.bf16.mxu0 0
        %584 = vmatpush1.bf16.msra.mxu0 %v551
        %585 = vmatprep.subr.bf16.mxu0 0
        %586 = vmatpush1.bf16.msra.mxu0 %v552
        %587 = vmatprep.subr.bf16.mxu0 0
        %588 = vmatpush1.bf16.msra.mxu0 %v553
        %589 = vmatprep.subr.bf16.mxu0 0
        %590 = vmatpush1.bf16.msra.mxu0 %v554
        %591 = vmatprep.subr.bf16.mxu0 0
        %592 = vmatpush1.bf16.msra.mxu0 %v555
        %593 = vmatprep.subr.bf16.mxu0 0
        %594 = vmatpush1.bf16.msra.mxu0 %v556
        %595 = vmatprep.subr.bf16.mxu0 0
        %596 = vmatpush1.bf16.msra.mxu0 %v557
        %597 = vmatprep.subr.bf16.mxu0 0
        %598 = vmatpush1.bf16.msra.mxu0 %v558
        %599 = vmatprep.subr.bf16.mxu0 0
        %600 = vmatpush1.bf16.msra.mxu0 %v559
        %601 = vmatprep.subr.bf16.mxu0 0
        %602 = vmatpush1.bf16.msra.mxu0 %v560
        %603 = vmatprep.subr.bf16.mxu0 0
        %604 = vmatpush1.bf16.msra.mxu0 %v561
        %605 = vmatprep.subr.bf16.mxu0 0
        %606 = vmatpush1.bf16.msra.mxu0 %v562
        %607 = vmatprep.subr.bf16.mxu0 0
        %608 = vmatpush1.bf16.msra.mxu0 %v563
        %609 = vmatprep.subr.bf16.mxu0 0
        %610 = vmatpush1.bf16.msra.mxu0 %v564
        %611 = vmatprep.subr.bf16.mxu0 0
        %612 = vmatpush1.bf16.msra.mxu0 %v565
        %613 = vmatprep.subr.bf16.mxu0 0
        %614 = vmatpush1.bf16.msra.mxu0 %v566
        %615 = vmatprep.mubr.bf16.mxu0 %v437
        %616 = vmatmul.mubr.bf16.gmra.mrb[0].mxu0 %v436
        %v617 = vpop.f32.mrb[0].mxu0
        %v618 = vadd.f32 %v485, %v617
        %v619 = vpop.f32.mrb[0].mxu0
        %v620 = vpop.f32.mrb[0].mxu0
        %v621 = vadd.f32 %v485, %v620
        %v622 = vpop.f32.mrb[0].mxu0
        %623 = vmatprep.mubr.bf16.mxu0 %v439
        %624 = vmatmul.mubr.bf16.gmra.mrb[0].mxu0 %v438
        %v625 = vpop.f32.mrb[0].mxu0
        %v626 = vadd.f32 %v485, %v625
        %v627 = vpop.f32.mrb[0].mxu0
        %v628 = vpop.f32.mrb[0].mxu0
        %v629 = vadd.f32 %v485, %v628
        %v630 = vpop.f32.mrb[0].mxu0
        %631 = vmatprep.mubr.bf16.mxu0 %v441
        %632 = vmatmul.mubr.bf16.gmra.mrb[0].mxu0 %v440
        %v633 = vpop.f32.mrb[0].mxu0
        %v634 = vadd.f32 %v485, %v633
        %v635 = vpop.f32.mrb[0].mxu0
        %v636 = vpop.f32.mrb[0].mxu0
        %v637 = vadd.f32 %v485, %v636
        %v638 = vpop.f32.mrb[0].mxu0
        %639 = vmatprep.mubr.bf16.mxu0 %v443
        %640 = vmatmul.mubr.bf16.gmra.mrb[0].mxu0 %v442
        %v641 = vpop.f32.mrb[0].mxu0
        %v642 = vadd.f32 %v485, %v641
        %v643 = vpop.f32.mrb[0].mxu0
        %v644 = vpop.f32.mrb[0].mxu0
        %v645 = vadd.f32 %v485, %v644
        %v646 = vpop.f32.mrb[0].mxu0
        %647 = vmatprep.mubr.bf16.mxu0 %v445
        %648 = vmatmul.mubr.bf16.gmra.mrb[0].mxu0 %v444
        %v649 = vpop.f32.mrb[0].mxu0
        %v650 = vadd.f32 %v485, %v649
        %v651 = vpop.f32.mrb[0].mxu0
        %v652 = vpop.f32.mrb[0].mxu0
        %v653 = vadd.f32 %v485, %v652
        %v654 = vpop.f32.mrb[0].mxu0
        %655 = vmatprep.mubr.bf16.mxu0 %v447
        %656 = vmatmul.mubr.bf16.gmra.mrb[0].mxu0 %v446
        %v657 = vpop.f32.mrb[0].mxu0
        %v658 = vadd.f32 %v485, %v657
        %v659 = vpop.f32.mrb[0].mxu0
        %v660 = vpop.f32.mrb[0].mxu0
        %v661 = vadd.f32 %v485, %v660
        %v662 = vpop.f32.mrb[0].mxu0
        %663 = vdwg.mxu0
        %v664 = vmax.f32 %v618, 0.0
        %v665 = vmax.f32 %v621, 0.0
        %v666 = vmax.f32 %v626, 0.0
        %v667 = vmax.f32 %v629, 0.0
        %v668 = vmax.f32 %v634, 0.0
        %v669 = vmax.f32 %v637, 0.0
        %v670 = vmax.f32 %v642, 0.0
        %v671 = vmax.f32 %v645, 0.0
        %v672 = vmax.f32 %v650, 0.0
        %v673 = vmax.f32 %v653, 0.0
        %v674 = vmax.f32 %v658, 0.0
        %v675 = vmax.f32 %v661, 0.0
        %v676 = vpack.c.bf16 %v665, %v664
        %v677 = vpack.c.bf16 %v667, %v666
        %v678 = vpack.c.bf16 %v669, %v668
        %v679 = vpack.c.bf16 %v671, %v670
        %v680 = vpack.c.bf16 %v673, %v672
        %v681 = vpack.c.bf16 %v675, %v674
        %v682 = vld [vmem:[%s3] sm:$0xf]
        %v683 = vld [vmem:[%s3 + $0x4] sm:$0xf]
        %v684 = vld [vmem:[%s3 + $0x8] sm:$0xf]
        %v685 = vld [vmem:[%s3 + $0xc] sm:$0xf]
        %v686 = vld [vmem:[%s3 + $0x10] sm:$0xf]
        %v687 = vld [vmem:[%s3 + $0x14] sm:$0xf]
        %v688 = vld [vmem:[%s3 + $0x18] sm:$0xf]
        %v689 = vld [vmem:[%s3 + $0x1c] sm:$0xf]
        %v690 = vld [vmem:[%s3 + $0x20] sm:$0xf]
        %v691 = vld [vmem:[%s3 + $0x24] sm:$0xf]
        %v692 = vld [vmem:[%s3 + $0x28] sm:$0xf]
        %v693 = vld [vmem:[%s3 + $0x2c] sm:$0xf]
        %v694 = vld [vmem:[%s3 + $0x30] sm:$0xf]
        %v695 = vld [vmem:[%s3 + $0x34] sm:$0xf]
        %v696 = vld [vmem:[%s3 + $0x38] sm:$0xf]
        %v697 = vld [vmem:[%s3 + $0x3c] sm:$0xf]
        %v698 = vld [vmem:[%s4] sm:$0x1]
        %v700 = vlaneseq
        %v701 = vshrl.u32 %v700, 7
        %v702 = vsub.s32 0, %v701
        %v703 = vrot.slane %v698, %v702
        %v721 = vunpack.c.l.b16 %v682
        %v722 = vunpack.c.l.b16 %v683
        %v723 = vunpack.c.l.b16 %v684
        %v724 = vunpack.c.l.b16 %v685
        %v725 = vunpack.c.l.b16 %v686
        %v726 = vunpack.c.l.b16 %v687
        %v727 = vunpack.c.l.b16 %v688
        %v728 = vunpack.c.l.b16 %v689
        %v729 = vunpack.c.l.b16 %v690
        %v730 = vunpack.c.l.b16 %v691
        %v731 = vunpack.c.l.b16 %v692
        %v732 = vunpack.c.l.b16 %v693
        %v733 = vunpack.c.l.b16 %v694
        %v734 = vunpack.c.l.b16 %v695
        %v735 = vunpack.c.l.b16 %v696
        %v736 = vunpack.c.l.b16 %v697
        %v737 = vpack.c.b16 %v722, %v721
        %v738 = vpack.c.b16 %v724, %v723
        %v739 = vpack.c.b16 %v726, %v725
        %v740 = vpack.c.b16 %v728, %v727
        %v741 = vpack.c.b16 %v730, %v729
        %v742 = vpack.c.b16 %v732, %v731
        %v743 = vpack.c.b16 %v734, %v733
        %v744 = vpack.c.b16 %v736, %v735
        %753 = vmatprep.subr.bf16.mxu0 0
        %754 = vmatpush1.bf16.msra.mxu0 %v737
        %755 = vmatprep.subr.bf16.mxu0 0
        %756 = vmatpush1.bf16.msra.mxu0 %v738
        %757 = vmatprep.subr.bf16.mxu0 0
        %758 = vmatpush1.bf16.msra.mxu0 %v739
        %759 = vmatprep.subr.bf16.mxu0 0
        %760 = vmatpush1.bf16.msra.mxu0 %v740
        %761 = vmatprep.subr.bf16.mxu0 0
        %762 = vmatpush1.bf16.msra.mxu0 %v741
        %763 = vmatprep.subr.bf16.mxu0 0
        %764 = vmatpush1.bf16.msra.mxu0 %v742
        %765 = vmatprep.subr.bf16.mxu0 0
        %766 = vmatpush1.bf16.msra.mxu0 %v743
        %767 = vmatprep.subr.bf16.mxu0 0
        %768 = vmatpush1.bf16.msra.mxu0 %v744
        %769 = vmatprep.subr.bf16.mxu0 0
        %770 = vmatpush1.bf16.msra.mxu0 0
        %771 = vmatprep.subr.bf16.mxu0 0
        %772 = vmatpush1.bf16.msra.mxu0 0
        %773 = vmatprep.subr.bf16.mxu0 0
        %774 = vmatpush1.bf16.msra.mxu0 0
        %775 = vmatprep.subr.bf16.mxu0 0
        %776 = vmatpush1.bf16.msra.mxu0 0
        %777 = vmatprep.subr.bf16.mxu0 0
        %778 = vmatpush1.bf16.msra.mxu0 0
        %779 = vmatprep.subr.bf16.mxu0 0
        %780 = vmatpush1.bf16.msra.mxu0 0
        %781 = vmatprep.subr.bf16.mxu0 0
        %782 = vmatpush1.bf16.msra.mxu0 0
        %783 = vmatprep.subr.bf16.mxu0 0
        %784 = vmatpush1.bf16.msra.mxu0 0
        %785 = vmatprep.mubr.bf16.mxu0 0
        %786 = vmatmul.mubr.bf16.gmra.mrb[0].mxu0 %v676
        %v787 = vpop.f32.mrb[0].mxu0
        %v788 = vadd.f32 %v703, %v787
        %v789 = vpop.f32.mrb[0].mxu0
        %v790 = vpop.f32.mrb[0].mxu0
        %v791 = vadd.f32 %v703, %v790
        %v792 = vpop.f32.mrb[0].mxu0
        %793 = vmatprep.mubr.bf16.mxu0 0
        %794 = vmatmul.mubr.bf16.gmra.mrb[0].mxu0 %v677
        %v795 = vpop.f32.mrb[0].mxu0
        %v796 = vadd.f32 %v703, %v795
        %v797 = vpop.f32.mrb[0].mxu0
        %v798 = vpop.f32.mrb[0].mxu0
        %v799 = vadd.f32 %v703, %v798
        %v800 = vpop.f32.mrb[0].mxu0
        %801 = vmatprep.mubr.bf16.mxu0 0
        %802 = vmatmul.mubr.bf16.gmra.mrb[0].mxu0 %v678
        %v803 = vpop.f32.mrb[0].mxu0
        %v804 = vadd.f32 %v703, %v803
        %v805 = vpop.f32.mrb[0].mxu0
        %v806 = vpop.f32.mrb[0].mxu0
        %v807 = vadd.f32 %v703, %v806
        %v808 = vpop.f32.mrb[0].mxu0
        %809 = vmatprep.mubr.bf16.mxu0 0
        %810 = vmatmul.mubr.bf16.gmra.mrb[0].mxu0 %v679
        %v811 = vpop.f32.mrb[0].mxu0
        %v812 = vadd.f32 %v703, %v811
        %v813 = vpop.f32.mrb[0].mxu0
        %v814 = vpop.f32.mrb[0].mxu0
        %v815 = vadd.f32 %v703, %v814
        %v816 = vpop.f32.mrb[0].mxu0
        %817 = vmatprep.mubr.bf16.mxu0 0
        %818 = vmatmul.mubr.bf16.gmra.mrb[0].mxu0 %v680
        %v819 = vpop.f32.mrb[0].mxu0
        %v820 = vadd.f32 %v703, %v819
        %v821 = vpop.f32.mrb[0].mxu0
        %v822 = vpop.f32.mrb[0].mxu0
        %v823 = vadd.f32 %v703, %v822
        %v824 = vpop.f32.mrb[0].mxu0
        %825 = vmatprep.mubr.bf16.mxu0 0
        %826 = vmatmul.mubr.bf16.gmra.mrb[0].mxu0 %v681
        %v827 = vpop.f32.mrb[0].mxu0
        %v828 = vadd.f32 %v703, %v827
        %v829 = vpop.f32.mrb[0].mxu0
        %v830 = vpop.f32.mrb[0].mxu0
        %v831 = vadd.f32 %v703, %v830
        %v832 = vpop.f32.mrb[0].mxu0
        %833 = vdwg.mxu0
        %v834 = vmax.f32 %v788, 0.0
        %v835 = vmax.f32 %v791, 0.0
        %v836 = vmax.f32 %v796, 0.0
        %v837 = vmax.f32 %v799, 0.0
        %v838 = vmax.f32 %v804, 0.0
        %v839 = vmax.f32 %v807, 0.0
        %v840 = vmax.f32 %v812, 0.0
        %v841 = vmax.f32 %v815, 0.0
        %v842 = vmax.f32 %v820, 0.0
        %v843 = vmax.f32 %v823, 0.0
        %v844 = vmax.f32 %v828, 0.0
        %v845 = vmax.f32 %v831, 0.0
        %v846 = vpack.c.bf16 %v835, %v834
        %v847 = vpack.c.bf16 %v837, %v836
        %v848 = vpack.c.bf16 %v839, %v838
        %v849 = vpack.c.bf16 %v841, %v840
        %v850 = vpack.c.bf16 %v843, %v842
        %v851 = vpack.c.bf16 %v845, %v844
        %v852 = vld [vmem:[#allocation6] sm:$0xf]
        %v853 = vld [vmem:[#allocation6 + $0x4] sm:$0xf]
        %v854 = vld [vmem:[#allocation6 + $0x8] sm:$0xf]
        %v855 = vld [vmem:[#allocation6 + $0xc] sm:$0xf]
        %v856 = vld [vmem:[#allocation6 + $0x10] sm:$0xf]
        %v857 = vld [vmem:[#allocation6 + $0x14] sm:$0xf]
        %v858 = vld [vmem:[#allocation6 + $0x18] sm:$0xf]
        %v859 = vld [vmem:[#allocation6 + $0x1c] sm:$0xf]
        %v860 = vld [vmem:[#allocation6 + $0x20] sm:$0xf]
        %v861 = vld [vmem:[#allocation6 + $0x24] sm:$0xf]
        %v862 = vld [vmem:[#allocation6 + $0x28] sm:$0xf]
        %v863 = vld [vmem:[#allocation6 + $0x2c] sm:$0xf]
        %v864 = vld [vmem:[#allocation6 + $0x30] sm:$0xf]
        %v865 = vld [vmem:[#allocation6 + $0x34] sm:$0xf]
        %v866 = vld [vmem:[#allocation6 + $0x38] sm:$0xf]
        %v867 = vld [vmem:[#allocation6 + $0x3c] sm:$0xf]
        %v868 = vld [vmem:[%s6] sm:$0x1]
        %v870 = vlaneseq
        %v871 = vshrl.u32 %v870, 7
        %v872 = vsub.s32 0, %v871
        %v873 = vrot.slane %v868, %v872
        %v891 = vunpack.c.l.b16 %v852
        %v892 = vunpack.c.l.b16 %v853
        %v893 = vunpack.c.l.b16 %v854
        %v894 = vunpack.c.l.b16 %v855
        %v895 = vunpack.c.l.b16 %v856
        %v896 = vunpack.c.l.b16 %v857
        %v897 = vunpack.c.l.b16 %v858
        %v898 = vunpack.c.l.b16 %v859
        %v899 = vunpack.c.l.b16 %v860
        %v900 = vunpack.c.l.b16 %v861
        %v901 = vunpack.c.l.b16 %v862
        %v902 = vunpack.c.l.b16 %v863
        %v903 = vunpack.c.l.b16 %v864
        %v904 = vunpack.c.l.b16 %v865
        %v905 = vunpack.c.l.b16 %v866
        %v906 = vunpack.c.l.b16 %v867
        %v907 = vpack.c.b16 %v892, %v891
        %v908 = vpack.c.b16 %v894, %v893
        %v909 = vpack.c.b16 %v896, %v895
        %v910 = vpack.c.b16 %v898, %v897
        %v911 = vpack.c.b16 %v900, %v899
        %v912 = vpack.c.b16 %v902, %v901
        %v913 = vpack.c.b16 %v904, %v903
        %v914 = vpack.c.b16 %v906, %v905
        %923 = vmatprep.subr.bf16.mxu0 0
        %924 = vmatpush1.bf16.msra.mxu0 %v907
        %925 = vmatprep.subr.bf16.mxu0 0
        %926 = vmatpush1.bf16.msra.mxu0 %v908
        %927 = vmatprep.subr.bf16.mxu0 0
        %928 = vmatpush1.bf16.msra.mxu0 %v909
        %929 = vmatprep.subr.bf16.mxu0 0
        %930 = vmatpush1.bf16.msra.mxu0 %v910
        %931 = vmatprep.subr.bf16.mxu0 0
        %932 = vmatpush1.bf16.msra.mxu0 %v911
        %933 = vmatprep.subr.bf16.mxu0 0
        %934 = vmatpush1.bf16.msra.mxu0 %v912
        %935 = vmatprep.subr.bf16.mxu0 0
        %936 = vmatpush1.bf16.msra.mxu0 %v913
        %937 = vmatprep.subr.bf16.mxu0 0
        %938 = vmatpush1.bf16.msra.mxu0 %v914
        %939 = vmatprep.subr.bf16.mxu0 0
        %940 = vmatpush1.bf16.msra.mxu0 0
        %941 = vmatprep.subr.bf16.mxu0 0
        %942 = vmatpush1.bf16.msra.mxu0 0
        %943 = vmatprep.subr.bf16.mxu0 0
        %944 = vmatpush1.bf16.msra.mxu0 0
        %945 = vmatprep.subr.bf16.mxu0 0
        %946 = vmatpush1.bf16.msra.mxu0 0
        %947 = vmatprep.subr.bf16.mxu0 0
        %948 = vmatpush1.bf16.msra.mxu0 0
        %949 = vmatprep.subr.bf16.mxu0 0
        %950 = vmatpush1.bf16.msra.mxu0 0
        %951 = vmatprep.subr.bf16.mxu0 0
        %952 = vmatpush1.bf16.msra.mxu0 0
        %953 = vmatprep.subr.bf16.mxu0 0
        %954 = vmatpush1.bf16.msra.mxu0 0
        %955 = vmatprep.mubr.bf16.mxu0 0
        %956 = vmatmul.mubr.bf16.gmra.mrb[0].mxu0 %v846
        %v957 = vpop.f32.mrb[0].mxu0
        %v958 = vadd.f32 %v873, %v957
        %v959 = vpop.f32.mrb[0].mxu0
        %v960 = vpop.f32.mrb[0].mxu0
        %v961 = vadd.f32 %v873, %v960
        %v962 = vpop.f32.mrb[0].mxu0
        %963 = vmatprep.mubr.bf16.mxu0 0
        %964 = vmatmul.mubr.bf16.gmra.mrb[0].mxu0 %v847
        %v965 = vpop.f32.mrb[0].mxu0
        %v966 = vadd.f32 %v873, %v965
        %v967 = vpop.f32.mrb[0].mxu0
        %v968 = vpop.f32.mrb[0].mxu0
        %v969 = vadd.f32 %v873, %v968
        %v970 = vpop.f32.mrb[0].mxu0
        %971 = vmatprep.mubr.bf16.mxu0 0
        %972 = vmatmul.mubr.bf16.gmra.mrb[0].mxu0 %v848
        %v973 = vpop.f32.mrb[0].mxu0
        %v974 = vadd.f32 %v873, %v973
        %v975 = vpop.f32.mrb[0].mxu0
        %v976 = vpop.f32.mrb[0].mxu0
        %v977 = vadd.f32 %v873, %v976
        %v978 = vpop.f32.mrb[0].mxu0
        %979 = vmatprep.mubr.bf16.mxu0 0
        %980 = vmatmul.mubr.bf16.gmra.mrb[0].mxu0 %v849
        %v981 = vpop.f32.mrb[0].mxu0
        %v982 = vadd.f32 %v873, %v981
        %v983 = vpop.f32.mrb[0].mxu0
        %v984 = vpop.f32.mrb[0].mxu0
        %v985 = vadd.f32 %v873, %v984
        %v986 = vpop.f32.mrb[0].mxu0
        %987 = vmatprep.mubr.bf16.mxu0 0
        %988 = vmatmul.mubr.bf16.gmra.mrb[0].mxu0 %v850
        %v989 = vpop.f32.mrb[0].mxu0
        %v990 = vadd.f32 %v873, %v989
        %v991 = vpop.f32.mrb[0].mxu0
        %v992 = vpop.f32.mrb[0].mxu0
        %v993 = vadd.f32 %v873, %v992
        %v994 = vpop.f32.mrb[0].mxu0
        %995 = vmatprep.mubr.bf16.mxu0 0
        %996 = vmatmul.mubr.bf16.gmra.mrb[0].mxu0 %v851
        %v997 = vpop.f32.mrb[0].mxu0
        %v998 = vadd.f32 %v873, %v997
        %v999 = vpop.f32.mrb[0].mxu0
        %v1000 = vpop.f32.mrb[0].mxu0
        %v1001 = vadd.f32 %v873, %v1000
        %v1002 = vpop.f32.mrb[0].mxu0
        %1003 = vdwg.mxu0
        %v1004 = vmax.f32 %v958, 0.0
        %v1005 = vmax.f32 %v961, 0.0
        %v1006 = vmax.f32 %v966, 0.0
        %v1007 = vmax.f32 %v969, 0.0
        %v1008 = vmax.f32 %v974, 0.0
        %v1009 = vmax.f32 %v977, 0.0
        %v1010 = vmax.f32 %v982, 0.0
        %v1011 = vmax.f32 %v985, 0.0
        %v1012 = vmax.f32 %v990, 0.0
        %v1013 = vmax.f32 %v993, 0.0
        %v1014 = vmax.f32 %v998, 0.0
        %v1015 = vmax.f32 %v1001, 0.0
        %v1016 = vpack.c.bf16 %v1005, %v1004
        %v1017 = vpack.c.bf16 %v1007, %v1006
        %v1018 = vpack.c.bf16 %v1009, %v1008
        %v1019 = vpack.c.bf16 %v1011, %v1010
        %v1020 = vpack.c.bf16 %v1013, %v1012
        %v1021 = vpack.c.bf16 %v1015, %v1014
        %v1022 = vld [vmem:[%s7] sm:$0xf]
        %v1023 = vld [vmem:[%s7 + $0x4] sm:$0xf]
        %v1024 = vld [vmem:[%s7 + $0x8] sm:$0xf]
        %v1025 = vld [vmem:[%s7 + $0xc] sm:$0xf]
        %v1026 = vld [vmem:[%s7 + $0x10] sm:$0xf]
        %v1027 = vld [vmem:[%s7 + $0x14] sm:$0xf]
        %v1028 = vld [vmem:[%s7 + $0x18] sm:$0xf]
        %v1029 = vld [vmem:[%s7 + $0x1c] sm:$0xf]
        %v1030 = vld [vmem:[%s7 + $0x20] sm:$0xf]
        %v1031 = vld [vmem:[%s7 + $0x24] sm:$0xf]
        %v1032 = vld [vmem:[%s7 + $0x28] sm:$0xf]
        %v1033 = vld [vmem:[%s7 + $0x2c] sm:$0xf]
        %v1034 = vld [vmem:[%s7 + $0x30] sm:$0xf]
        %v1035 = vld [vmem:[%s7 + $0x34] sm:$0xf]
        %v1036 = vld [vmem:[%s7 + $0x38] sm:$0xf]
        %v1037 = vld [vmem:[%s7 + $0x3c] sm:$0xf]
        %v1038 = vld [vmem:[%s8] sm:$0x1]
        %v1040 = vlaneseq
        %v1041 = vshrl.u32 %v1040, 7
        %v1042 = vsub.s32 0, %v1041
        %v1043 = vrot.slane %v1038, %v1042
        %v1061 = vunpack.c.l.b16 %v1022
        %v1062 = vunpack.c.l.b16 %v1023
        %v1063 = vunpack.c.l.b16 %v1024
        %v1064 = vunpack.c.l.b16 %v1025
        %v1065 = vunpack.c.l.b16 %v1026
        %v1066 = vunpack.c.l.b16 %v1027
        %v1067 = vunpack.c.l.b16 %v1028
        %v1068 = vunpack.c.l.b16 %v1029
        %v1069 = vunpack.c.l.b16 %v1030
        %v1070 = vunpack.c.l.b16 %v1031
        %v1071 = vunpack.c.l.b16 %v1032
        %v1072 = vunpack.c.l.b16 %v1033
        %v1073 = vunpack.c.l.b16 %v1034
        %v1074 = vunpack.c.l.b16 %v1035
        %v1075 = vunpack.c.l.b16 %v1036
        %v1076 = vunpack.c.l.b16 %v1037
        %v1077 = vpack.c.b16 %v1062, %v1061
        %v1078 = vpack.c.b16 %v1064, %v1063
        %v1079 = vpack.c.b16 %v1066, %v1065
        %v1080 = vpack.c.b16 %v1068, %v1067
        %v1081 = vpack.c.b16 %v1070, %v1069
        %v1082 = vpack.c.b16 %v1072, %v1071
        %v1083 = vpack.c.b16 %v1074, %v1073
        %v1084 = vpack.c.b16 %v1076, %v1075
        %1093 = vmatprep.subr.bf16.mxu0 0
        %1094 = vmatpush1.bf16.msra.mxu0 %v1077
        %1095 = vmatprep.subr.bf16.mxu0 0
        %1096 = vmatpush1.bf16.msra.mxu0 %v1078
        %1097 = vmatprep.subr.bf16.mxu0 0
        %1098 = vmatpush1.bf16.msra.mxu0 %v1079
        %1099 = vmatprep.subr.bf16.mxu0 0
        %1100 = vmatpush1.bf16.msra.mxu0 %v1080
        %1101 = vmatprep.subr.bf16.mxu0 0
        %1102 = vmatpush1.bf16.msra.mxu0 %v1081
        %1103 = vmatprep.subr.bf16.mxu0 0
        %1104 = vmatpush1.bf16.msra.mxu0 %v1082
        %1105 = vmatprep.subr.bf16.mxu0 0
        %1106 = vmatpush1.bf16.msra.mxu0 %v1083
        %1107 = vmatprep.subr.bf16.mxu0 0
        %1108 = vmatpush1.bf16.msra.mxu0 %v1084
        %1109 = vmatprep.subr.bf16.mxu0 0
        %1110 = vmatpush1.bf16.msra.mxu0 0
        %1111 = vmatprep.subr.bf16.mxu0 0
        %1112 = vmatpush1.bf16.msra.mxu0 0
        %1113 = vmatprep.subr.bf16.mxu0 0
        %1114 = vmatpush1.bf16.msra.mxu0 0
        %1115 = vmatprep.subr.bf16.mxu0 0
        %1116 = vmatpush1.bf16.msra.mxu0 0
        %1117 = vmatprep.subr.bf16.mxu0 0
        %1118 = vmatpush1.bf16.msra.mxu0 0
        %1119 = vmatprep.subr.bf16.mxu0 0
        %1120 = vmatpush1.bf16.msra.mxu0 0
        %1121 = vmatprep.subr.bf16.mxu0 0
        %1122 = vmatpush1.bf16.msra.mxu0 0
        %1123 = vmatprep.subr.bf16.mxu0 0
        %1124 = vmatpush1.bf16.msra.mxu0 0
        %1125 = vmatprep.mubr.bf16.mxu0 0
        %1126 = vmatmul.mubr.bf16.gmra.mrb[0].mxu0 %v1016
        %v1127 = vpop.f32.mrb[0].mxu0
        %v1128 = vadd.f32 %v1043, %v1127
        %v1129 = vpop.f32.mrb[0].mxu0
        %v1130 = vpop.f32.mrb[0].mxu0
        %v1131 = vadd.f32 %v1043, %v1130
        %v1132 = vpop.f32.mrb[0].mxu0
        %1133 = vmatprep.mubr.bf16.mxu0 0
        %1134 = vmatmul.mubr.bf16.gmra.mrb[0].mxu0 %v1017
        %v1135 = vpop.f32.mrb[0].mxu0
        %v1136 = vadd.f32 %v1043, %v1135
        %v1137 = vpop.f32.mrb[0].mxu0
        %v1138 = vpop.f32.mrb[0].mxu0
        %v1139 = vadd.f32 %v1043, %v1138
        %v1140 = vpop.f32.mrb[0].mxu0
        %1141 = vmatprep.mubr.bf16.mxu0 0
        %1142 = vmatmul.mubr.bf16.gmra.mrb[0].mxu0 %v1018
        %v1143 = vpop.f32.mrb[0].mxu0
        %v1144 = vadd.f32 %v1043, %v1143
        %v1145 = vpop.f32.mrb[0].mxu0
        %v1146 = vpop.f32.mrb[0].mxu0
        %v1147 = vadd.f32 %v1043, %v1146
        %v1148 = vpop.f32.mrb[0].mxu0
        %1149 = vmatprep.mubr.bf16.mxu0 0
        %1150 = vmatmul.mubr.bf16.gmra.mrb[0].mxu0 %v1019
        %v1151 = vpop.f32.mrb[0].mxu0
        %v1152 = vadd.f32 %v1043, %v1151
        %v1153 = vpop.f32.mrb[0].mxu0
        %v1154 = vpop.f32.mrb[0].mxu0
        %v1155 = vadd.f32 %v1043, %v1154
        %v1156 = vpop.f32.mrb[0].mxu0
        %1157 = vmatprep.mubr.bf16.mxu0 0
        %1158 = vmatmul.mubr.bf16.gmra.mrb[0].mxu0 %v1020
        %v1159 = vpop.f32.mrb[0].mxu0
        %v1160 = vadd.f32 %v1043, %v1159
        %v1161 = vpop.f32.mrb[0].mxu0
        %v1162 = vpop.f32.mrb[0].mxu0
        %v1163 = vadd.f32 %v1043, %v1162
        %v1164 = vpop.f32.mrb[0].mxu0
        %1165 = vmatprep.mubr.bf16.mxu0 0
        %1166 = vmatmul.mubr.bf16.gmra.mrb[0].mxu0 %v1021
        %v1167 = vpop.f32.mrb[0].mxu0
        %v1168 = vadd.f32 %v1043, %v1167
        %v1169 = vpop.f32.mrb[0].mxu0
        %v1170 = vpop.f32.mrb[0].mxu0
        %v1171 = vadd.f32 %v1043, %v1170
        %v1172 = vpop.f32.mrb[0].mxu0
        %1173 = vdwg.mxu0
        %v1174 = vxor.u32 %v1128, 2147483648
        %v1175 = vxor.u32 %v1131, 2147483648
        %v1176 = vxor.u32 %v1136, 2147483648
        %v1177 = vxor.u32 %v1139, 2147483648
        %v1178 = vxor.u32 %v1144, 2147483648
        %v1179 = vxor.u32 %v1147, 2147483648
        %v1180 = vxor.u32 %v1152, 2147483648
        %v1181 = vxor.u32 %v1155, 2147483648
        %v1182 = vxor.u32 %v1160, 2147483648
        %v1183 = vxor.u32 %v1163, 2147483648
        %v1184 = vxor.u32 %v1168, 2147483648
        %v1185 = vxor.u32 %v1171, 2147483648
        %v1186 = vmul.f32 %v1174, 1.442695
        %v1187 = vpow.pop %v1186
        %v1188 = vmul.f32 %v1175, 1.442695
        %v1189 = vpow.pop %v1188
        %v1190 = vmul.f32 %v1176, 1.442695
        %v1191 = vpow.pop %v1190
        %v1192 = vmul.f32 %v1177, 1.442695
        %v1193 = vpow.pop %v1192
        %v1194 = vmul.f32 %v1178, 1.442695
        %v1195 = vpow.pop %v1194
        %v1196 = vmul.f32 %v1179, 1.442695
        %v1197 = vpow.pop %v1196
        %v1198 = vmul.f32 %v1180, 1.442695
        %v1199 = vpow.pop %v1198
        %v1200 = vmul.f32 %v1181, 1.442695
        %v1201 = vpow.pop %v1200
        %v1202 = vmul.f32 %v1182, 1.442695
        %v1203 = vpow.pop %v1202
        %v1204 = vmul.f32 %v1183, 1.442695
        %v1205 = vpow.pop %v1204
        %v1206 = vmul.f32 %v1184, 1.442695
        %v1207 = vpow.pop %v1206
        %v1208 = vmul.f32 %v1185, 1.442695
        %v1209 = vpow.pop %v1208
        %v1210 = vadd.f32 %v1187, 1.0
        %v1211 = vadd.f32 %v1189, 1.0
        %v1212 = vadd.f32 %v1191, 1.0
        %v1213 = vadd.f32 %v1193, 1.0
        %v1214 = vadd.f32 %v1195, 1.0
        %v1215 = vadd.f32 %v1197, 1.0
        %v1216 = vadd.f32 %v1199, 1.0
        %v1217 = vadd.f32 %v1201, 1.0
        %v1218 = vadd.f32 %v1203, 1.0
        %v1219 = vadd.f32 %v1205, 1.0
        %v1220 = vadd.f32 %v1207, 1.0
        %v1221 = vadd.f32 %v1209, 1.0
        %v1222 = vrcp.pop %v1210
        %v1223 = vmul.f32 1.0, %v1222
        %v1224 = vrcp.pop %v1211
        %v1225 = vmul.f32 1.0, %v1224
        %v1226 = vrcp.pop %v1212
        %v1227 = vmul.f32 1.0, %v1226
        %v1228 = vrcp.pop %v1213
        %v1229 = vmul.f32 1.0, %v1228
        %v1230 = vrcp.pop %v1214
        %v1231 = vmul.f32 1.0, %v1230
        %v1232 = vrcp.pop %v1215
        %v1233 = vmul.f32 1.0, %v1232
        %v1234 = vrcp.pop %v1216
        %v1235 = vmul.f32 1.0, %v1234
        %v1236 = vrcp.pop %v1217
        %v1237 = vmul.f32 1.0, %v1236
        %v1238 = vrcp.pop %v1218
        %v1239 = vmul.f32 1.0, %v1238
        %v1240 = vrcp.pop %v1219
        %v1241 = vmul.f32 1.0, %v1240
        %v1242 = vrcp.pop %v1220
        %v1243 = vmul.f32 1.0, %v1242
        %v1244 = vrcp.pop %v1221
        %v1245 = vmul.f32 1.0, %v1244
        %vm1246 = vcmask 64512
        %1247 = vst.msk [vmem:[%s409] sm:$0xff] %vm1246, %v1223
        %1248 = vst.msk [vmem:[%s409 + $0x8] sm:$0xff] %vm1246, %v1225
        %1249 = vst.msk [vmem:[%s409 + $0x10] sm:$0xff] %vm1246, %v1227
        %1250 = vst.msk [vmem:[%s409 + $0x18] sm:$0xff] %vm1246, %v1229
        %1251 = vst.msk [vmem:[%s409 + $0x20] sm:$0xff] %vm1246, %v1231
        %1252 = vst.msk [vmem:[%s409 + $0x28] sm:$0xff] %vm1246, %v1233
        %1253 = vst.msk [vmem:[%s409 + $0x30] sm:$0xff] %vm1246, %v1235
        %1254 = vst.msk [vmem:[%s409 + $0x38] sm:$0xff] %vm1246, %v1237
        %1255 = vst.msk [vmem:[%s409 + $0x40] sm:$0xff] %vm1246, %v1239
        %1256 = vst.msk [vmem:[%s409 + $0x48] sm:$0xff] %vm1246, %v1241
        %1257 = vst.msk [vmem:[%s409 + $0x50] sm:$0xff] %vm1246, %v1243
        %1258 = vst.msk [vmem:[%s409 + $0x58] sm:$0xff] %vm1246, %v1245
        %s1259 = smul.u32 12, %s29
        %p1260 = scmp.lt.s32.totalorder %s28, 1
        %s1261 = scalar_select %p1260, %s28, 1
        %p1262 = scmp.lt.s32.totalorder %s1259, 11
        %s1263 = scalar_select %p1262, %s1259, 11
        %s1264 = smul.addr %s1261, 12
        %s1265 = sadd.s32 %s1263, %s1264
        %s1266 = smul.addr %s1265, 8
        %s1267 = scalar_lea.vmem %s9, %s1266
        // Predicated region
        $region69: #{tpu_custom_call.1} parent=55 // pred_check
          %p1268 = pneg %p252
        $region70: #{tpu_custom_call.1} parent=55 // pred_check_branch
          %1270 = sbr.rel (%p1268) target = $region72
        $region71: #{tpu_custom_call.1} parent=55 // pred_region
          %s1271 = smul.u32 12, %s29
        $region72: #{tpu_custom_call.1} parent=55 // pred_fallthru
          _
      $region56: #{tpu_custom_call.1} parent=5 // pred_fallthru
        _
      %p1272 = scmp.le.s32.totalorder 2, %s19
      // Predicated region
      $region73: #{tpu_custom_call.1} parent=5 // pred_check
        %p1273 = pneg %p1272
      $region74: #{tpu_custom_call.1} parent=5 // pred_check_branch
        %1275 = sbr.rel (%p1273) target = $region76
      $region75: #{tpu_custom_call.1} parent=5 // pred_region
        %s1276 = ssub.s32 %s19, 2
        // Predicated region
        $region77: #{tpu_custom_call.1} parent=75 // pred_check
          %p1277 = pneg %p258
        $region78: #{tpu_custom_call.1} parent=75 // pred_check_branch
          %1279 = sbr.rel (%p1277) target = $region80
        $region79: #{tpu_custom_call.1} parent=75 // pred_region
          %s1280 = smul.u32 12, %s31
          %p1281 = scmp.lt.s32.totalorder %s30, 1
          %s1282 = scalar_select %p1281, %s30, 1
          %p1283 = scmp.lt.s32.totalorder %s1280, 11
          %s1284 = scalar_select %p1283, %s1280, 11
          %s1285 = smul.addr %s1282, 12
          %s1286 = sadd.s32 %s1284, %s1285
          %s1287 = smul.addr %s1286, 8
          %s1288 = scalar_lea.vmem %s9, %s1287
        $region80: #{tpu_custom_call.1} parent=75 // pred_fallthru
          _
      $region76: #{tpu_custom_call.1} parent=5 // pred_fallthru
        _
    $region6: #{tpu_custom_call.1} parent=1 // loop_footer
      %s23 = sadd.s32 1, %s19
    $region7: #{tpu_custom_call.1} parent=1 // loop_footer_branch
      %18 = sbr.rel target = $region3
    $region8: #{tpu_custom_call.1} parent=1 // loop_exit
      _
    %1289 = vsyncpa [#allocation3], 1
    %s1290 = scalar_lea.sflag [#allocation3], 1
    %1291 = vsyncpa %s1290, 1
    %1292 = vsyncpa [#allocation5], 1

</llo_original>
